<compile_context>
chip_gen: v5e
topology: v5e:2x2
jax: 0.10.0
libtpu: 0.0.40
codegen_flags: <defaults>
</compile_context>

<pallas_src>
import functools
import math

import jax
import jax.numpy as jnp
from jax.experimental import pallas as pl
from jax.experimental.pallas import tpu as pltpu

_VMEM_LIMIT = 32 * 1024 * 1024  # explicit scoped-VMEM request (v5e default is only 16 MiB)


# ---------------- helpers ----------------

def _pick_tile(dim, target, align):
    """Largest tile <= target that is either the full dim or an `align`-multiple divisor."""
    if dim <= target:
        return dim
    t = (target // align) * align
    while t >= align:
        if dim % t == 0:
            assert dim % t == 0
            return t
        t -= align
    # Fallback: full extent (always legal). NOTE: for awkward dims this means one big block;
    # callers should keep such dims modest or pad them so it cannot exceed scoped VMEM.
    return dim


def _round_up(x, m):
    return (x + m - 1) // m * m


# ---------------- fused attention block (QKV + MHA + out-proj + residual + LN1) ----------------

def _attn_block_kernel(x_ref, wq_ref, bq_ref, wkv_ref, bkv_ref, wo_ref, bo_ref,
                       g_ref, b_ref, o_ref, ctx_ref, *, nheads, head_dim, tq, eps):
    d = nheads * head_dim
    S = x_ref.shape[1]
    qi = pl.program_id(1)

    x_full = x_ref[0]                                          # (S, d) f32 : K/V source
    if tq == S:                                                # single q tile (demo path)
        xq = x_full
    else:
        q0 = pl.multiple_of(qi * tq, tq)
        xq = x_ref[0, pl.ds(q0, tq), :]                        # (tq, d) f32 : query rows / residual

    xq_b = xq.astype(jnp.bfloat16)
    xf_b = x_full.astype(jnp.bfloat16)

    # Full-width projections: MXU N = d (Q) and 2d (K|V), not head_dim. Scale folded into Wq/bq.
    q = jnp.dot(xq_b, wq_ref[...], preferred_element_type=jnp.float32) + bq_ref[...]     # (tq, d)
    kv = jnp.dot(xf_b, wkv_ref[...], preferred_element_type=jnp.float32) + bkv_ref[...]  # (S, 2d)

    for h in range(nheads):                                    # static unroll (small H)
        lo, hi = h * head_dim, (h + 1) * head_dim
        q_h = q[:, lo:hi].astype(jnp.bfloat16)                 # (tq, dh)
        k_h = kv[:, lo:hi].astype(jnp.bfloat16)                # (S, dh)
        v_h = kv[:, d + lo:d + hi].astype(jnp.bfloat16)        # (S, dh)

        # scores = q @ k^T via transposed contraction (no explicit transpose)
        s = jax.lax.dot_general(q_h, k_h, (((1,), (1,)), ((), ())),
                                preferred_element_type=jnp.float32)                      # (tq, S)
        s = s - jnp.max(s, axis=-1, keepdims=True)
        p = jnp.exp(s)
        p = p * pl.reciprocal(jnp.sum(p, axis=-1, keepdims=True), approx=True)

        o_h = jnp.dot(p.astype(jnp.bfloat16), v_h, preferred_element_type=jnp.float32)   # (tq, dh)
        ctx_ref[:, lo:hi] = o_h.astype(jnp.bfloat16)           # head-concat context in VMEM scratch

    # ONE full-width out-projection (K = d), then residual + post-norm LayerNorm (f32).
    y = xq + bo_ref[...] + jnp.dot(ctx_ref[...], wo_ref[...],
                                   preferred_element_type=jnp.float32)                   # (tq, d)
    mean = jnp.mean(y, axis=-1, keepdims=True)
    cen = y - mean
    var = jnp.mean(cen * cen, axis=-1, keepdims=True)
    o_ref[0] = cen * jax.lax.rsqrt(var + eps) * g_ref[...] + b_ref[...]


def attention_block(x, layer, eps=1e-5):
    # x: (B, S, d) f32
    B, S, d = x.shape
    H = layer["nheads"]
    dh = d // H
    tq = _pick_tile(S, 256, 8)
    num_q = S // tq
    kern = functools.partial(_attn_block_kernel, nheads=H, head_dim=dh, tq=tq, eps=eps)
    const2 = lambda bb, qq: (0, 0)
    return pl.pallas_call(
        kern,
        out_shape=jax.ShapeDtypeStruct((B, S, d), jnp.float32),
        grid=(B, num_q),
        in_specs=[
            # full sequence for this batch; index constant over q -> re-fetch skipped by pipeline
            pl.BlockSpec((1, S, d), lambda bb, qq: (bb, 0, 0)),
            pl.BlockSpec((d, d), const2),        # wq  (1/sqrt(dh) folded)
            pl.BlockSpec((1, d), const2),        # bq
            pl.BlockSpec((d, 2 * d), const2),    # wkv = [Wk | Wv]
            pl.BlockSpec((1, 2 * d), const2),    # bkv
            pl.BlockSpec((d, d), const2),        # wo
            pl.BlockSpec((1, d), const2),        # bo
            pl.BlockSpec((1, d), const2),        # ln1 gamma
            pl.BlockSpec((1, d), const2),        # ln1 beta
        ],
        out_specs=pl.BlockSpec((1, tq, d), lambda bb, qq: (bb, qq, 0)),
        scratch_shapes=[pltpu.VMEM((tq, d), jnp.bfloat16)],    # head-concat context buffer
        compiler_params=pltpu.CompilerParams(
            dimension_semantics=("parallel", "parallel"),
            vmem_limit_bytes=_VMEM_LIMIT),
    )(x, layer["wq"], layer["bq"], layer["wkv"], layer["bkv"],
      layer["wo"], layer["bo"], layer["ln1_g"], layer["ln1_b"])


# ---------------- fused feed-forward block (FF1 + ReLU + FF2 + residual + LN2), dff-chunked ----------------

def _ff_block_kernel(x_ref, w1_ref, b1_ref, w2_ref, b2_ref, g_ref, b_ref, o_ref,
                     *, eps, chunk, n_chunks):
    x = x_ref[...]                                             # (tm, d) f32
    xb = x.astype(jnp.bfloat16)
    y = x + b2_ref[...]                                        # residual + FF2 bias (f32)
    for c in range(n_chunks):                                  # never materialize (tm, dff)
        lo, hi = c * chunk, (c + 1) * chunk
        f = jnp.dot(xb, w1_ref[:, lo:hi], preferred_element_type=jnp.float32) + b1_ref[:, lo:hi]
        f = jnp.maximum(f, 0.0)
        y = y + jnp.dot(f.astype(jnp.bfloat16), w2_ref[lo:hi, :],
                        preferred_element_type=jnp.float32)    # accumulate (tm, d)
    mean = jnp.mean(y, axis=-1, keepdims=True)
    cen = y - mean
    var = jnp.mean(cen * cen, axis=-1, keepdims=True)
    o_ref[...] = (cen * jax.lax.rsqrt(var + eps) * g_ref[...] + b_ref[...]).astype(o_ref.dtype)


def ff_block(x2d, layer, eps=1e-5, out_dtype=jnp.float32):
    # x2d: (N, d) f32; out_dtype=bf16 for the last layer so the vocab projection streams bf16.
    N, d = x2d.shape
    dff = layer["w1"].shape[1]
    tm = _pick_tile(N, 256, 8)
    chunk = _pick_tile(dff, 512, 128)
    n_chunks = dff // chunk
    kern = functools.partial(_ff_block_kernel, eps=eps, chunk=chunk, n_chunks=n_chunks)
    const = lambda i: (0, 0)
    return pl.pallas_call(
        kern,
        out_shape=jax.ShapeDtypeStruct((N, d), out_dtype),
        grid=(N // tm,),
        in_specs=[
            pl.BlockSpec((tm, d), lambda i: (i, 0)),
            pl.BlockSpec((d, dff), const),
            pl.BlockSpec((1, dff), const),
            pl.BlockSpec((dff, d), const),
            pl.BlockSpec((1, d), const),
            pl.BlockSpec((1, d), const),
            pl.BlockSpec((1, d), const),
        ],
        out_specs=pl.BlockSpec((tm, d), lambda i: (i, 0)),
        compiler_params=pltpu.CompilerParams(
            dimension_semantics=("parallel",),
            vmem_limit_bytes=_VMEM_LIMIT),
    )(x2d, layer["w1"], layer["b1"], layer["w2"], layer["b2"], layer["ln2_g"], layer["ln2_b"])


# ---------------- final vocab projection: tiled matmul, bias epilogue, transpose folded into out_spec ----------------

def _vocab_proj_kernel(x_ref, w_ref, b_ref, o_ref, acc_ref):
    @pl.when(pl.program_id(3) == 0)
    def _():
        acc_ref[...] = jnp.zeros_like(acc_ref)

    acc_ref[...] += jnp.dot(x_ref[0], w_ref[...], preferred_element_type=jnp.float32)

    @pl.when(pl.program_id(3) == pl.num_programs(3) - 1)
    def _():
        o_ref[...] = acc_ref[...] + b_ref[...]


def vocab_projection(x_bf16, w, b, *, ts_target=256, tn_target=1024, tk_target=512):
    """x: (B, S, d) bf16, w: (d, Vp) bf16, b: (1, Vp) f32  ->  (S, B*Vp) f32 (seq-major).

    The (B,S)->(S,B) permutation is folded into the output index_map, so the largest tensor
    is written directly in its final layout. Tile targets sized so the per-step footprint
    (double-buffered x/w/out + f32 acc scratch) stays well under v7x's 64 MiB VMEM while
    moving multi-MiB per grid step on v5e/v6e.
    """
    B, S, d = x_bf16.shape
    Vp = w.shape[1]
    ts = _pick_tile(S, ts_target, 8)
    tn = _pick_tile(Vp, tn_target, 128)
    tk = _pick_tile(d, tk_target, 128)
    nb_n = Vp // tn
    return pl.pallas_call(
        _vocab_proj_kernel,
        out_shape=jax.ShapeDtypeStruct((S, B * Vp), jnp.float32),
        grid=(B, S // ts, nb_n, d // tk),
        in_specs=[
            pl.BlockSpec((1, ts, tk), lambda bb, s, n, k: (bb, s, k)),   # bf16 activations
            pl.BlockSpec((tk, tn), lambda bb, s, n, k: (k, n)),          # bf16 weights
            pl.BlockSpec((1, tn), lambda bb, s, n, k: (0, n)),           # f32 bias
        ],
        out_specs=pl.BlockSpec((ts, tn), lambda bb, s, n, k: (s, bb * nb_n + n)),
        scratch_shapes=[pltpu.VMEM((ts, tn), jnp.float32)],
        compiler_params=pltpu.CompilerParams(
            dimension_semantics=("parallel", "parallel", "parallel", "arbitrary"),
            vmem_limit_bytes=_VMEM_LIMIT),
    )(x_bf16, w, b)


# ---------------- parameters (deterministic, synthetic) ----------------

def init_params(key, vocab, d_model, nhead, num_layers, dim_ff=2048):
    d, H = d_model, nhead
    dh = d // H
    scale = 1.0 / math.sqrt(dh)
    vocab_p = _round_up(vocab, 128)          # lane-dense logit stores
    keys = jax.random.split(key, 2 + num_layers)

    def dense(k, shape, s):
        return jax.random.normal(k, shape, jnp.float32) * s

    fc_w = dense(keys[1], (d, vocab), 1.0 / math.sqrt(d))
    fc_b = jnp.zeros((1, vocab), jnp.float32)
    if vocab_p != vocab:
        fc_w = jnp.pad(fc_w, ((0, 0), (0, vocab_p - vocab)))
        fc_b = jnp.pad(fc_b, ((0, 0), (0, vocab_p - vocab)))

    params = {
        "vocab": vocab,
        "emb": dense(keys[0], (vocab, d), 1.0),
        "fc_w": fc_w.astype(jnp.bfloat16),
        "fc_b": fc_b,
        "layers": [],
    }

    for li in range(num_layers):
        lk = jax.random.split(keys[2 + li], 6)
        # qkv = x @ in_w + in_b, columns in head-concat order: [Q | K | V]
        in_w = dense(lk[0], (d, 3 * d), 1.0 / math.sqrt(d))
        in_b = jnp.zeros((1, 3 * d), jnp.float32)
        wo_t = dense(lk[1], (d, d), 1.0 / math.sqrt(d))   # rows in head-concat order
        params["layers"].append(dict(
            nheads=H,
            wq=(in_w[:, :d] * scale).astype(jnp.bfloat16),    # 1/sqrt(head_dim) folded in
            bq=in_b[:, :d] * scale,
            wkv=in_w[:, d:].astype(jnp.bfloat16),             # (d, 2d) = [Wk | Wv]
            bkv=in_b[:, d:],
            wo=wo_t.astype(jnp.bfloat16),
            bo=jnp.zeros((1, d), jnp.float32),
            w1=dense(lk[2], (d, dim_ff), 1.0 / math.sqrt(d)).astype(jnp.bfloat16),
            b1=dense(lk[3], (1, dim_ff), 0.01),
            w2=dense(lk[4], (dim_ff, d), 1.0 / math.sqrt(dim_ff)).astype(jnp.bfloat16),
            b2=dense(lk[5], (1, d), 0.01),
            ln1_g=jnp.ones((1, d), jnp.float32), ln1_b=jnp.zeros((1, d), jnp.float32),
            ln2_g=jnp.ones((1, d), jnp.float32), ln2_b=jnp.zeros((1, d), jnp.float32),
        ))
    return params


# ---------------- forward ----------------

def forward(tokens, params, *, d_model):
    # tokens: (S, B) int32, output: (S, B, vocab) — matches PyTorch batch_first=False.
    S, B = tokens.shape
    vocab = params["vocab"]

    # Embedding lookup (gather) kept as XLA glue; activations kept as (B, S, d) internally.
    # TODO(synk): embedding gather could be a scalar-prefetch DMA-gather Pallas kernel.
    x = jnp.take(params["emb"], tokens.T, axis=0)                 # (B, S, d) f32

    n_layers = len(params["layers"])
    for li, layer in enumerate(params["layers"]):
        x = attention_block(x, layer)                             # fused QKV+MHA+out-proj+res+LN1
        out_dtype = jnp.bfloat16 if li == n_layers - 1 else jnp.float32
        x = ff_block(x.reshape(B * S, d_model), layer,
                     out_dtype=out_dtype).reshape(B, S, d_model)  # fused FF(chunked)+res+LN2

    logits = vocab_projection(x, params["fc_w"], params["fc_b"])  # (S, B*Vp) f32, seq-major
    Vp = params["fc_w"].shape[1]
    logits = logits.reshape(S, B, Vp)
    if Vp != vocab:
        logits = logits[:, :, :vocab]                             # drop lane-padding columns
    return logits                                                 # (S, B, vocab)


if __name__ == "__main__":
    vocab_size, d_model, nhead, num_encoder_layers = 64, 32, 4, 2
    seq, batch = 8, 2

    key = jax.random.PRNGKey(0)
    pkey, tkey = jax.random.split(key)
    params = init_params(pkey, vocab_size, d_model, nhead, num_encoder_layers)
    tokens = jax.random.randint(tkey, (seq, batch), 0, vocab_size, dtype=jnp.int32)

    out = forward(tokens, params, d_model=d_model)
    out = jax.block_until_ready(out)
    assert out.shape == (seq, batch, vocab_size), out.shape
    assert bool(jnp.all(jnp.isfinite(out)))
    print("KERNEL_OK")
</pallas_src>

<mosaic_0001>
module attributes {stable_mosaic.version = 11 : i64} {
  func.func @_attn_block_kernel(%arg0: i32, %arg1: i32, %arg2: memref<1x8x32xf32, #tpu.memory_space<vmem>>, %arg3: memref<32x32xbf16, #tpu.memory_space<vmem>>, %arg4: memref<1x32xf32, #tpu.memory_space<vmem>>, %arg5: memref<32x64xbf16, #tpu.memory_space<vmem>>, %arg6: memref<1x64xf32, #tpu.memory_space<vmem>>, %arg7: memref<32x32xbf16, #tpu.memory_space<vmem>>, %arg8: memref<1x32xf32, #tpu.memory_space<vmem>>, %arg9: memref<1x32xf32, #tpu.memory_space<vmem>>, %arg10: memref<1x32xf32, #tpu.memory_space<vmem>>, %arg11: memref<1x8x32xf32, #tpu.memory_space<vmem>>, %arg12: memref<8x32xbf16, #tpu.memory_space<vmem>>) attributes {dimension_semantics = [#tpu.dimension_semantics<parallel>, #tpu.dimension_semantics<parallel>], iteration_bounds = array<i64: 2, 1>, scalar_prefetch = 0 : i64, scratch_operands = 1 : i64, tpu.core_type = #tpu.core_type<tc>, window_params = [{transform_indices = @transform_0, window_bounds = array<i64: 1, 8, 32>}, {pipeline_mode = #tpu.pipeline_mode<synchronous>, transform_indices = @transform_1, window_bounds = array<i64: 32, 32>}, {pipeline_mode = #tpu.pipeline_mode<synchronous>, transform_indices = @transform_2, window_bounds = array<i64: 1, 32>}, {pipeline_mode = #tpu.pipeline_mode<synchronous>, transform_indices = @transform_3, window_bounds = array<i64: 32, 64>}, {pipeline_mode = #tpu.pipeline_mode<synchronous>, transform_indices = @transform_4, window_bounds = array<i64: 1, 64>}, {pipeline_mode = #tpu.pipeline_mode<synchronous>, transform_indices = @transform_5, window_bounds = array<i64: 32, 32>}, {pipeline_mode = #tpu.pipeline_mode<synchronous>, transform_indices = @transform_6, window_bounds = array<i64: 1, 32>}, {pipeline_mode = #tpu.pipeline_mode<synchronous>, transform_indices = @transform_7, window_bounds = array<i64: 1, 32>}, {pipeline_mode = #tpu.pipeline_mode<synchronous>, transform_indices = @transform_8, window_bounds = array<i64: 1, 32>}, {transform_indices = @transform_9, window_bounds = array<i64: 1, 8, 32>}]} {
    %c0 = arith.constant 0 : index
    %c0_0 = arith.constant 0 : index
    %c0_1 = arith.constant 0 : index
    %0 = vector.load %arg2[%c0, %c0_0, %c0_1] : memref<1x8x32xf32, #tpu.memory_space<vmem>>, vector<1x8x32xf32>
    %1 = vector.shape_cast %0 : vector<1x8x32xf32> to vector<8x32xf32>
    %2 = arith.truncf %1 : vector<8x32xf32> to vector<8x32xbf16>
    %3 = arith.truncf %1 : vector<8x32xf32> to vector<8x32xbf16>
    %c0_2 = arith.constant 0 : index
    %c0_3 = arith.constant 0 : index
    %4 = vector.load %arg3[%c0_2, %c0_3] : memref<32x32xbf16, #tpu.memory_space<vmem>>, vector<32x32xbf16>
    %cst = arith.constant dense<0.000000e+00> : vector<8x32xf32>
    %5 = tpu.matmul %2, %4, %cst {dimension_numbers = #tpu.dot_dimension_numbers<[1], [0], [0], [1], [0, 0, 1, 1], [], []>} : vector<8x32xbf16>, vector<32x32xbf16>, vector<8x32xf32> -> vector<8x32xf32>
    %c0_4 = arith.constant 0 : index
    %c0_5 = arith.constant 0 : index
    %6 = vector.load %arg4[%c0_4, %c0_5] : memref<1x32xf32, #tpu.memory_space<vmem>>, vector<1x32xf32>
    %7 = vector.broadcast %6 : vector<1x32xf32> to vector<8x32xf32>
    %8 = arith.addf %5, %7 : vector<8x32xf32>
    %c0_6 = arith.constant 0 : index
    %c0_7 = arith.constant 0 : index
    %9 = vector.load %arg5[%c0_6, %c0_7] : memref<32x64xbf16, #tpu.memory_space<vmem>>, vector<32x64xbf16>
    %cst_8 = arith.constant dense<0.000000e+00> : vector<8x64xf32>
    %10 = tpu.matmul %3, %9, %cst_8 {dimension_numbers = #tpu.dot_dimension_numbers<[1], [0], [0], [1], [0, 0, 1, 1], [], []>} : vector<8x32xbf16>, vector<32x64xbf16>, vector<8x64xf32> -> vector<8x64xf32>
    %c0_9 = arith.constant 0 : index
    %c0_10 = arith.constant 0 : index
    %11 = vector.load %arg6[%c0_9, %c0_10] : memref<1x64xf32, #tpu.memory_space<vmem>>, vector<1x64xf32>
    %12 = vector.broadcast %11 : vector<1x64xf32> to vector<8x64xf32>
    %13 = arith.addf %10, %12 : vector<8x64xf32>
    %14 = vector.extract_strided_slice %8 {offsets = [0, 0], sizes = [8, 8], strides = [1, 1]} : vector<8x32xf32> to vector<8x8xf32>
    %15 = arith.truncf %14 : vector<8x8xf32> to vector<8x8xbf16>
    %16 = vector.extract_strided_slice %13 {offsets = [0, 0], sizes = [8, 8], strides = [1, 1]} : vector<8x64xf32> to vector<8x8xf32>
    %17 = arith.truncf %16 : vector<8x8xf32> to vector<8x8xbf16>
    %18 = vector.extract_strided_slice %13 {offsets = [0, 32], sizes = [8, 8], strides = [1, 1]} : vector<8x64xf32> to vector<8x8xf32>
    %19 = arith.truncf %18 : vector<8x8xf32> to vector<8x8xbf16>
    %cst_11 = arith.constant dense<0.000000e+00> : vector<8x8xf32>
    %20 = tpu.matmul %15, %17, %cst_11 {dimension_numbers = #tpu.dot_dimension_numbers<[1], [1], [0], [0], [0, 0, 1, 0], [], []>} : vector<8x8xbf16>, vector<8x8xbf16>, vector<8x8xf32> -> vector<8x8xf32>
    %cst_12 = arith.constant dense<0xFF800000> : vector<8xf32>
    %21 = vector.multi_reduction <maximumf>, %20, %cst_12 [1] : vector<8x8xf32> to vector<8xf32>
    %22 = vector.shape_cast %21 : vector<8xf32> to vector<8x1xf32>
    %23 = vector.broadcast %22 : vector<8x1xf32> to vector<8x8xf32>
    %24 = arith.subf %20, %23 : vector<8x8xf32>
    %25 = math.exp %24 : vector<8x8xf32>
    %cst_13 = arith.constant dense<0.000000e+00> : vector<8xf32>
    %26 = vector.multi_reduction <add>, %25, %cst_13 [1] : vector<8x8xf32> to vector<8xf32>
    %27 = vector.shape_cast %26 : vector<8xf32> to vector<8x1xf32>
    %28 = tpu.reciprocal %27 {approx = true} : vector<8x1xf32> -> vector<8x1xf32>
    %29 = vector.broadcast %28 : vector<8x1xf32> to vector<8x8xf32>
    %30 = arith.mulf %25, %29 : vector<8x8xf32>
    %31 = arith.truncf %30 : vector<8x8xf32> to vector<8x8xbf16>
    %cst_14 = arith.constant dense<0.000000e+00> : vector<8x8xf32>
    %32 = tpu.matmul %31, %19, %cst_14 {dimension_numbers = #tpu.dot_dimension_numbers<[1], [0], [0], [1], [0, 0, 1, 1], [], []>} : vector<8x8xbf16>, vector<8x8xbf16>, vector<8x8xf32> -> vector<8x8xf32>
    %33 = arith.truncf %32 : vector<8x8xf32> to vector<8x8xbf16>
    %c0_15 = arith.constant 0 : index
    %c0_16 = arith.constant 0 : index
    %34 = vector.load %arg12[%c0_15, %c0_16] : memref<8x32xbf16, #tpu.memory_space<vmem>>, vector<8x8xbf16>
    tpu.vector_store %arg12[%c0_15, %c0_16], %33 {strides = array<i32>} : memref<8x32xbf16, #tpu.memory_space<vmem>>, vector<8x8xbf16>,
    %35 = vector.extract_strided_slice %8 {offsets = [0, 8], sizes = [8, 8], strides = [1, 1]} : vector<8x32xf32> to vector<8x8xf32>
    %36 = arith.truncf %35 : vector<8x8xf32> to vector<8x8xbf16>
    %37 = vector.extract_strided_slice %13 {offsets = [0, 8], sizes = [8, 8], strides = [1, 1]} : vector<8x64xf32> to vector<8x8xf32>
    %38 = arith.truncf %37 : vector<8x8xf32> to vector<8x8xbf16>
    %39 = vector.extract_strided_slice %13 {offsets = [0, 40], sizes = [8, 8], strides = [1, 1]} : vector<8x64xf32> to vector<8x8xf32>
    %40 = arith.truncf %39 : vector<8x8xf32> to vector<8x8xbf16>
    %cst_17 = arith.constant dense<0.000000e+00> : vector<8x8xf32>
    %41 = tpu.matmul %36, %38, %cst_17 {dimension_numbers = #tpu.dot_dimension_numbers<[1], [1], [0], [0], [0, 0, 1, 0], [], []>} : vector<8x8xbf16>, vector<8x8xbf16>, vector<8x8xf32> -> vector<8x8xf32>
    %cst_18 = arith.constant dense<0xFF800000> : vector<8xf32>
    %42 = vector.multi_reduction <maximumf>, %41, %cst_18 [1] : vector<8x8xf32> to vector<8xf32>
    %43 = vector.shape_cast %42 : vector<8xf32> to vector<8x1xf32>
    %44 = vector.broadcast %43 : vector<8x1xf32> to vector<8x8xf32>
    %45 = arith.subf %41, %44 : vector<8x8xf32>
    %46 = math.exp %45 : vector<8x8xf32>
    %cst_19 = arith.constant dense<0.000000e+00> : vector<8xf32>
    %47 = vector.multi_reduction <add>, %46, %cst_19 [1] : vector<8x8xf32> to vector<8xf32>
    %48 = vector.shape_cast %47 : vector<8xf32> to vector<8x1xf32>
    %49 = tpu.reciprocal %48 {approx = true} : vector<8x1xf32> -> vector<8x1xf32>
    %50 = vector.broadcast %49 : vector<8x1xf32> to vector<8x8xf32>
    %51 = arith.mulf %46, %50 : vector<8x8xf32>
    %52 = arith.truncf %51 : vector<8x8xf32> to vector<8x8xbf16>
    %cst_20 = arith.constant dense<0.000000e+00> : vector<8x8xf32>
    %53 = tpu.matmul %52, %40, %cst_20 {dimension_numbers = #tpu.dot_dimension_numbers<[1], [0], [0], [1], [0, 0, 1, 1], [], []>} : vector<8x8xbf16>, vector<8x8xbf16>, vector<8x8xf32> -> vector<8x8xf32>
    %54 = arith.truncf %53 : vector<8x8xf32> to vector<8x8xbf16>
    %c0_21 = arith.constant 0 : index
    %c8 = arith.constant 8 : index
    %55 = vector.load %arg12[%c0_21, %c8] : memref<8x32xbf16, #tpu.memory_space<vmem>>, vector<8x8xbf16>
    tpu.vector_store %arg12[%c0_21, %c8], %54 {strides = array<i32>} : memref<8x32xbf16, #tpu.memory_space<vmem>>, vector<8x8xbf16>,
    %56 = vector.extract_strided_slice %8 {offsets = [0, 16], sizes = [8, 8], strides = [1, 1]} : vector<8x32xf32> to vector<8x8xf32>
    %57 = arith.truncf %56 : vector<8x8xf32> to vector<8x8xbf16>
    %58 = vector.extract_strided_slice %13 {offsets = [0, 16], sizes = [8, 8], strides = [1, 1]} : vector<8x64xf32> to vector<8x8xf32>
    %59 = arith.truncf %58 : vector<8x8xf32> to vector<8x8xbf16>
    %60 = vector.extract_strided_slice %13 {offsets = [0, 48], sizes = [8, 8], strides = [1, 1]} : vector<8x64xf32> to vector<8x8xf32>
    %61 = arith.truncf %60 : vector<8x8xf32> to vector<8x8xbf16>
    %cst_22 = arith.constant dense<0.000000e+00> : vector<8x8xf32>
    %62 = tpu.matmul %57, %59, %cst_22 {dimension_numbers = #tpu.dot_dimension_numbers<[1], [1], [0], [0], [0, 0, 1, 0], [], []>} : vector<8x8xbf16>, vector<8x8xbf16>, vector<8x8xf32> -> vector<8x8xf32>
    %cst_23 = arith.constant dense<0xFF800000> : vector<8xf32>
    %63 = vector.multi_reduction <maximumf>, %62, %cst_23 [1] : vector<8x8xf32> to vector<8xf32>
    %64 = vector.shape_cast %63 : vector<8xf32> to vector<8x1xf32>
    %65 = vector.broadcast %64 : vector<8x1xf32> to vector<8x8xf32>
    %66 = arith.subf %62, %65 : vector<8x8xf32>
    %67 = math.exp %66 : vector<8x8xf32>
    %cst_24 = arith.constant dense<0.000000e+00> : vector<8xf32>
    %68 = vector.multi_reduction <add>, %67, %cst_24 [1] : vector<8x8xf32> to vector<8xf32>
    %69 = vector.shape_cast %68 : vector<8xf32> to vector<8x1xf32>
    %70 = tpu.reciprocal %69 {approx = true} : vector<8x1xf32> -> vector<8x1xf32>
    %71 = vector.broadcast %70 : vector<8x1xf32> to vector<8x8xf32>
    %72 = arith.mulf %67, %71 : vector<8x8xf32>
    %73 = arith.truncf %72 : vector<8x8xf32> to vector<8x8xbf16>
    %cst_25 = arith.constant dense<0.000000e+00> : vector<8x8xf32>
    %74 = tpu.matmul %73, %61, %cst_25 {dimension_numbers = #tpu.dot_dimension_numbers<[1], [0], [0], [1], [0, 0, 1, 1], [], []>} : vector<8x8xbf16>, vector<8x8xbf16>, vector<8x8xf32> -> vector<8x8xf32>
    %75 = arith.truncf %74 : vector<8x8xf32> to vector<8x8xbf16>
    %c0_26 = arith.constant 0 : index
    %c16 = arith.constant 16 : index
    %76 = vector.load %arg12[%c0_26, %c16] : memref<8x32xbf16, #tpu.memory_space<vmem>>, vector<8x8xbf16>
    tpu.vector_store %arg12[%c0_26, %c16], %75 {strides = array<i32>} : memref<8x32xbf16, #tpu.memory_space<vmem>>, vector<8x8xbf16>,
    %77 = vector.extract_strided_slice %8 {offsets = [0, 24], sizes = [8, 8], strides = [1, 1]} : vector<8x32xf32> to vector<8x8xf32>
    %78 = arith.truncf %77 : vector<8x8xf32> to vector<8x8xbf16>
    %79 = vector.extract_strided_slice %13 {offsets = [0, 24], sizes = [8, 8], strides = [1, 1]} : vector<8x64xf32> to vector<8x8xf32>
    %80 = arith.truncf %79 : vector<8x8xf32> to vector<8x8xbf16>
    %81 = vector.extract_strided_slice %13 {offsets = [0, 56], sizes = [8, 8], strides = [1, 1]} : vector<8x64xf32> to vector<8x8xf32>
    %82 = arith.truncf %81 : vector<8x8xf32> to vector<8x8xbf16>
    %cst_27 = arith.constant dense<0.000000e+00> : vector<8x8xf32>
    %83 = tpu.matmul %78, %80, %cst_27 {dimension_numbers = #tpu.dot_dimension_numbers<[1], [1], [0], [0], [0, 0, 1, 0], [], []>} : vector<8x8xbf16>, vector<8x8xbf16>, vector<8x8xf32> -> vector<8x8xf32>
    %cst_28 = arith.constant dense<0xFF800000> : vector<8xf32>
    %84 = vector.multi_reduction <maximumf>, %83, %cst_28 [1] : vector<8x8xf32> to vector<8xf32>
    %85 = vector.shape_cast %84 : vector<8xf32> to vector<8x1xf32>
    %86 = vector.broadcast %85 : vector<8x1xf32> to vector<8x8xf32>
    %87 = arith.subf %83, %86 : vector<8x8xf32>
    %88 = math.exp %87 : vector<8x8xf32>
    %cst_29 = arith.constant dense<0.000000e+00> : vector<8xf32>
    %89 = vector.multi_reduction <add>, %88, %cst_29 [1] : vector<8x8xf32> to vector<8xf32>
    %90 = vector.shape_cast %89 : vector<8xf32> to vector<8x1xf32>
    %91 = tpu.reciprocal %90 {approx = true} : vector<8x1xf32> -> vector<8x1xf32>
    %92 = vector.broadcast %91 : vector<8x1xf32> to vector<8x8xf32>
    %93 = arith.mulf %88, %92 : vector<8x8xf32>
    %94 = arith.truncf %93 : vector<8x8xf32> to vector<8x8xbf16>
    %cst_30 = arith.constant dense<0.000000e+00> : vector<8x8xf32>
    %95 = tpu.matmul %94, %82, %cst_30 {dimension_numbers = #tpu.dot_dimension_numbers<[1], [0], [0], [1], [0, 0, 1, 1], [], []>} : vector<8x8xbf16>, vector<8x8xbf16>, vector<8x8xf32> -> vector<8x8xf32>
    %96 = arith.truncf %95 : vector<8x8xf32> to vector<8x8xbf16>
    %c0_31 = arith.constant 0 : index
    %c24 = arith.constant 24 : index
    %97 = vector.load %arg12[%c0_31, %c24] : memref<8x32xbf16, #tpu.memory_space<vmem>>, vector<8x8xbf16>
    tpu.vector_store %arg12[%c0_31, %c24], %96 {strides = array<i32>} : memref<8x32xbf16, #tpu.memory_space<vmem>>, vector<8x8xbf16>,
    %c0_32 = arith.constant 0 : index
    %c0_33 = arith.constant 0 : index
    %98 = vector.load %arg8[%c0_32, %c0_33] : memref<1x32xf32, #tpu.memory_space<vmem>>, vector<1x32xf32>
    %99 = vector.broadcast %98 : vector<1x32xf32> to vector<8x32xf32>
    %100 = arith.addf %1, %99 : vector<8x32xf32>
    %c0_34 = arith.constant 0 : index
    %c0_35 = arith.constant 0 : index
    %101 = vector.load %arg12[%c0_34, %c0_35] : memref<8x32xbf16, #tpu.memory_space<vmem>>, vector<8x32xbf16>
    %c0_36 = arith.constant 0 : index
    %c0_37 = arith.constant 0 : index
    %102 = vector.load %arg7[%c0_36, %c0_37] : memref<32x32xbf16, #tpu.memory_space<vmem>>, vector<32x32xbf16>
    %cst_38 = arith.constant dense<0.000000e+00> : vector<8x32xf32>
    %103 = tpu.matmul %101, %102, %cst_38 {dimension_numbers = #tpu.dot_dimension_numbers<[1], [0], [0], [1], [0, 0, 1, 1], [], []>} : vector<8x32xbf16>, vector<32x32xbf16>, vector<8x32xf32> -> vector<8x32xf32>
    %104 = arith.addf %100, %103 : vector<8x32xf32>
    %cst_39 = arith.constant dense<0.000000e+00> : vector<8xf32>
    %105 = vector.multi_reduction <add>, %104, %cst_39 [1] : vector<8x32xf32> to vector<8xf32>
    %106 = vector.shape_cast %105 : vector<8xf32> to vector<8x1xf32>
    %cst_40 = arith.constant 3.200000e+01 : f32
    %107 = vector.broadcast %cst_40 : f32 to vector<8x1xf32>
    %108 = arith.divf %106, %107 : vector<8x1xf32>
    %109 = vector.broadcast %108 : vector<8x1xf32> to vector<8x32xf32>
    %110 = arith.subf %104, %109 : vector<8x32xf32>
    %111 = arith.mulf %110, %110 : vector<8x32xf32>
    %cst_41 = arith.constant dense<0.000000e+00> : vector<8xf32>
    %112 = vector.multi_reduction <add>, %111, %cst_41 [1] : vector<8x32xf32> to vector<8xf32>
    %113 = vector.shape_cast %112 : vector<8xf32> to vector<8x1xf32>
    %cst_42 = arith.constant 3.200000e+01 : f32
    %114 = vector.broadcast %cst_42 : f32 to vector<8x1xf32>
    %115 = arith.divf %113, %114 : vector<8x1xf32>
    %cst_43 = arith.constant 9.99999974E-6 : f32
    %116 = vector.broadcast %cst_43 : f32 to vector<8x1xf32>
    %117 = arith.addf %115, %116 : vector<8x1xf32>
    %118 = math.rsqrt %117 : vector<8x1xf32>
    %119 = vector.broadcast %118 : vector<8x1xf32> to vector<8x32xf32>
    %120 = arith.mulf %110, %119 : vector<8x32xf32>
    %c0_44 = arith.constant 0 : index
    %c0_45 = arith.constant 0 : index
    %121 = vector.load %arg9[%c0_44, %c0_45] : memref<1x32xf32, #tpu.memory_space<vmem>>, vector<1x32xf32>
    %122 = vector.broadcast %121 : vector<1x32xf32> to vector<8x32xf32>
    %123 = arith.mulf %120, %122 : vector<8x32xf32>
    %c0_46 = arith.constant 0 : index
    %c0_47 = arith.constant 0 : index
    %124 = vector.load %arg10[%c0_46, %c0_47] : memref<1x32xf32, #tpu.memory_space<vmem>>, vector<1x32xf32>
    %125 = vector.broadcast %124 : vector<1x32xf32> to vector<8x32xf32>
    %126 = arith.addf %123, %125 : vector<8x32xf32>
    %c0_48 = arith.constant 0 : index
    %c0_49 = arith.constant 0 : index
    %c0_50 = arith.constant 0 : index
    %127 = vector.load %arg11[%c0_48, %c0_49, %c0_50] : memref<1x8x32xf32, #tpu.memory_space<vmem>>, vector<1x8x32xf32>
    %128 = vector.shape_cast %127 : vector<1x8x32xf32> to vector<8x32xf32>
    %129 = vector.shape_cast %126 : vector<8x32xf32> to vector<1x8x32xf32>
    tpu.vector_store %arg11[%c0_48, %c0_49, %c0_50], %129 {strides = array<i32>} : memref<1x8x32xf32, #tpu.memory_space<vmem>>, vector<1x8x32xf32>,
    return
  }
  func.func @transform_0(%arg0: i32, %arg1: i32) -> (i32, i32, i32) {
    %c0_i32 = arith.constant 0 : i32
    %c0_i32_0 = arith.constant 0 : i32
    %c0_i32_1 = arith.constant 0 : i32
    return %arg0, %c0_i32, %c0_i32_0 : i32, i32, i32
  }
  func.func @transform_1(%arg0: i32, %arg1: i32) -> (i32, i32) {
    %c0_i32 = arith.constant 0 : i32
    %c0_i32_0 = arith.constant 0 : i32
    %c0_i32_1 = arith.constant 0 : i32
    return %c0_i32, %c0_i32_0 : i32, i32
  }
  func.func @transform_2(%arg0: i32, %arg1: i32) -> (i32, i32) {
    %c0_i32 = arith.constant 0 : i32
    %c0_i32_0 = arith.constant 0 : i32
    %c0_i32_1 = arith.constant 0 : i32
    return %c0_i32, %c0_i32_0 : i32, i32
  }
  func.func @transform_3(%arg0: i32, %arg1: i32) -> (i32, i32) {
    %c0_i32 = arith.constant 0 : i32
    %c0_i32_0 = arith.constant 0 : i32
    %c0_i32_1 = arith.constant 0 : i32
    return %c0_i32, %c0_i32_0 : i32, i32
  }
  func.func @transform_4(%arg0: i32, %arg1: i32) -> (i32, i32) {
    %c0_i32 = arith.constant 0 : i32
    %c0_i32_0 = arith.constant 0 : i32
    %c0_i32_1 = arith.constant 0 : i32
    return %c0_i32, %c0_i32_0 : i32, i32
  }
  func.func @transform_5(%arg0: i32, %arg1: i32) -> (i32, i32) {
    %c0_i32 = arith.constant 0 : i32
    %c0_i32_0 = arith.constant 0 : i32
    %c0_i32_1 = arith.constant 0 : i32
    return %c0_i32, %c0_i32_0 : i32, i32
  }
  func.func @transform_6(%arg0: i32, %arg1: i32) -> (i32, i32) {
    %c0_i32 = arith.constant 0 : i32
    %c0_i32_0 = arith.constant 0 : i32
    %c0_i32_1 = arith.constant 0 : i32
    return %c0_i32, %c0_i32_0 : i32, i32
  }
  func.func @transform_7(%arg0: i32, %arg1: i32) -> (i32, i32) {
    %c0_i32 = arith.constant 0 : i32
    %c0_i32_0 = arith.constant 0 : i32
    %c0_i32_1 = arith.constant 0 : i32
    return %c0_i32, %c0_i32_0 : i32, i32
  }
  func.func @transform_8(%arg0: i32, %arg1: i32) -> (i32, i32) {
    %c0_i32 = arith.constant 0 : i32
    %c0_i32_0 = arith.constant 0 : i32
    %c0_i32_1 = arith.constant 0 : i32
    return %c0_i32, %c0_i32_0 : i32, i32
  }
  func.func @transform_9(%arg0: i32, %arg1: i32) -> (i32, i32, i32) {
    %c0_i32 = arith.constant 0 : i32
    %c0_i32_0 = arith.constant 0 : i32
    return %arg0, %arg1, %c0_i32 : i32, i32, i32
  }
}

</mosaic_0001>

<llo_original>
// kernel: tpu_custom_call.1
$region0: #{tpu_custom_call.1}
  #allocation0 [shape = 'u32[]', space=smem, size = 0x4, offset = 0x4, fixed_abs, tag = 'smem constant byte address 0x4 - core index']
  #allocation1 [shape = 'u32[72,128]{1,0:T(1,128)}', space=vmem, size = 0x9000, scoped, tag = 'internal scratch']
  #allocation2 [shape = 'bf16[8,32]{1,0:T(8,128)(2,1)}', space=vmem, size = 0x800, scoped, tag = 'scratch operand']
  %s0 = inlined_call_operand.hbm [shape: f32[2,8,32], index: 0, kind: input, shape index: {}]
  %s1 = inlined_call_operand.hbm [shape: bf16[32,32], index: 1, kind: input, shape index: {}]
  %s2 = inlined_call_operand.vmem [shape: f32[1,32], index: 2, kind: input, shape index: {}]
  %s3 = inlined_call_operand.hbm [shape: bf16[32,64], index: 3, kind: input, shape index: {}]
  %s4 = inlined_call_operand.vmem [shape: f32[1,64], index: 4, kind: input, shape index: {}]
  %s5 = inlined_call_operand.hbm [shape: bf16[32,32], index: 5, kind: input, shape index: {}]
  %s6 = inlined_call_operand.vmem [shape: f32[1,32], index: 6, kind: input, shape index: {}]
  %s7 = inlined_call_operand.vmem [shape: f32[1,32], index: 7, kind: input, shape index: {}]
  %s8 = inlined_call_operand.vmem [shape: f32[1,32], index: 8, kind: input, shape index: {}]
  %s9 = inlined_call_operand.hbm [shape: f32[2,8,32], index: 9, kind: output, shape index: {}]
  %s10 = sld [smem:[#allocation0]]
  $region85: #{tpu_custom_call.1} parent=0
    _
  %s12 = ssub.s32 1, %s10
  %s13 = scalar_select 0, %s12, %s10
  $region1: #{tpu_custom_call.1} parent=0
    #allocation3 [shape = 'u8[8192]{0}', space=vmem, size = 0x2000, scoped, tag = 'input window, operand 0']
    #allocation4 [shape = 's32[2]{0}', space=sflag, size = 0x8, scoped, tag = 'scoped memory for tpu_custom_call.1']
    #allocation5 [shape = 's32[2]{0}', space=sflag, size = 0x8, scoped, tag = 'scoped memory for tpu_custom_call.1']
    #allocation6 [shape = 'u8[8192]{0}', space=vmem, size = 0x2000, scoped, tag = 'input window, operand 1, single buffered']
    #allocation7 [shape = 's32[1]{0}', space=sflag, size = 0x4, scoped, tag = 'scoped memory for tpu_custom_call.1']
    #allocation8 [shape = 'u8[8192]{0}', space=vmem, size = 0x2000, scoped, tag = 'input window, operand 3, single buffered']
    #allocation9 [shape = 'u8[8192]{0}', space=vmem, size = 0x2000, scoped, tag = 'input window, operand 5, single buffered']
    #allocation10 [shape = 's32[1]{0}', space=sflag, size = 0x4, scoped, tag = 'scoped memory for tpu_custom_call.1']
    #allocation11 [shape = 'u8[8192]{0}', space=vmem, size = 0x2000, scoped, tag = 'output window, operand 0']
    %14 = vsyncpa [#allocation4], 0
    %s15 = scalar_lea.sflag [#allocation4], 1
    %16 = vsyncpa %s15, 0
    %17 = vsyncpa [#allocation7], 0
    %18 = vsyncpa [#allocation10], 0
    %19 = vsyncpa [#allocation5], 0
    %s20 = scalar_lea.sflag [#allocation5], 1
    %21 = vsyncpa %s20, 0
    loop: start=0, step=1, limit=4
    $region2: #{tpu_custom_call.1} parent=1 // loop_pre_header
      _
    $region3: #{tpu_custom_call.1} parent=1 // loop_header
      %s23 = sphi 0, %s27
      %p24 = scmp.ge.s32.totalorder %s23, 4
      %s30 = sphi 0, %s42
      %s31 = sphi 0, %s38
      %s32 = sphi 0, %s30
      %s33 = sphi 0, %s31
      %s34 = sphi 0, %s32
      %s35 = sphi 0, %s33
      %s45 = sphi 0, %s47
      %s48 = sphi 0, %s45
      %s49 = sphi 0, %s48
      %s65 = sphi 0, %s49
      %s69 = sphi 0, %s69
      %s71 = sphi 0, %s69
      %s72 = sphi 0, %s71
      %s86 = sphi 0, %s72
      %s90 = sphi 0, %s90
      %s92 = sphi 0, %s90
      %s93 = sphi 0, %s92
      %s107 = sphi 0, %s93
      %s111 = sphi 0, %s111
      %s113 = sphi 0, %s111
      %s114 = sphi 0, %s113
      %s128 = sphi 0, %s114
      %s132 = sphi 0, %s132
      %s134 = sphi 0, %s132
      %s135 = sphi 0, %s134
      %s149 = sphi 0, %s135
      %s153 = sphi 0, %s153
      %s155 = sphi 0, %s153
      %s156 = sphi 0, %s155
      %s170 = sphi 0, %s156
      %s174 = sphi 0, %s174
      %s176 = sphi 0, %s174
      %s177 = sphi 0, %s176
      %s191 = sphi 0, %s177
      %s195 = sphi 0, %s195
      %s197 = sphi 0, %s195
      %s198 = sphi 0, %s197
      %s212 = sphi 0, %s198
      %s216 = sphi 0, %s216
      %s218 = sphi 0, %s216
      %s219 = sphi 0, %s218
      %s233 = sphi 0, %s219
      %s241 = sphi 0, %s243
      %s244 = sphi 0, %s241
      %s245 = sphi 0, %s244
      %s261 = sphi 0, %s245
    $region4: #{tpu_custom_call.1} parent=1 // loop_header_branch
      %26 = sbr.rel (%p24) target = $region8
    $region5: #{tpu_custom_call.1} parent=1 // loop_body
      %s28 = ssub.s32 %s23, 1
      %s29 = ssub.s32 %s23, 2
      %s36 = sadd.s32 1, %s31
      %p37 = scmp.ge.s32.totalorder %s36, 1
      %s38 = scalar_select %p37, 0, %s36
      %s39 = sadd.s32 1, %s30
      %s40 = scalar_select %p37, %s39, %s30
      %p41 = scmp.ge.s32.totalorder %s40, 2
      %s42 = scalar_select %p41, 0, %s40
      %s43 = ssub.s32 %s30, %s42
      %p44 = scmp.eq.s32.totalorder %s43, 0
      %s46 = sadd.s32 %s45, 1
      %s47 = scalar_select %p44, %s45, %s46
      %p50 = pneg %p44
      %p51 = scmp.eq.s32.totalorder %s23, 1
      %p52 = por %p50, %p51
      %p53 = scmp.ne.s32.totalorder %s45, %s48
      %p54 = scmp.eq.s32.totalorder %s23, 0
      %p55 = por %p53, %p54
      %p56 = scmp.ne.s32.totalorder %s45, %s48
      %p57 = scmp.eq.s32.totalorder %s28, 1
      %p58 = por %p56, %p57
      %p59 = scmp.ne.s32.totalorder %s48, %s49
      %p60 = scmp.eq.s32.totalorder %s28, 0
      %p61 = por %p59, %p60
      %p62 = scmp.ne.s32.totalorder %s48, %s49
      %p63 = scmp.eq.s32.totalorder %s29, 1
      %p64 = por %p62, %p63
      %p66 = scmp.ne.s32.totalorder %s49, %s65
      %p67 = scmp.eq.s32.totalorder %s29, 0
      %p68 = por %p66, %p67
      %s70 = sadd.s32 %s69, 1
      %p73 = scmp.eq.s32.totalorder %s23, 1
      %p74 = scmp.ne.s32.totalorder %s69, %s71
      %p75 = scmp.eq.s32.totalorder %s23, 0
      %p76 = por %p74, %p75
      %p77 = scmp.ne.s32.totalorder %s69, %s71
      %p78 = scmp.eq.s32.totalorder %s28, 1
      %p79 = por %p77, %p78
      %p80 = scmp.ne.s32.totalorder %s71, %s72
      %p81 = scmp.eq.s32.totalorder %s28, 0
      %p82 = por %p80, %p81
      %p83 = scmp.ne.s32.totalorder %s71, %s72
      %p84 = scmp.eq.s32.totalorder %s29, 1
      %p85 = por %p83, %p84
      %p87 = scmp.ne.s32.totalorder %s72, %s86
      %p88 = scmp.eq.s32.totalorder %s29, 0
      %p89 = por %p87, %p88
      %s91 = sadd.s32 %s90, 1
      %p94 = scmp.eq.s32.totalorder %s23, 1
      %p95 = scmp.ne.s32.totalorder %s90, %s92
      %p96 = scmp.eq.s32.totalorder %s23, 0
      %p97 = por %p95, %p96
      %p98 = scmp.ne.s32.totalorder %s90, %s92
      %p99 = scmp.eq.s32.totalorder %s28, 1
      %p100 = por %p98, %p99
      %p101 = scmp.ne.s32.totalorder %s92, %s93
      %p102 = scmp.eq.s32.totalorder %s28, 0
      %p103 = por %p101, %p102
      %p104 = scmp.ne.s32.totalorder %s92, %s93
      %p105 = scmp.eq.s32.totalorder %s29, 1
      %p106 = por %p104, %p105
      %p108 = scmp.ne.s32.totalorder %s93, %s107
      %p109 = scmp.eq.s32.totalorder %s29, 0
      %p110 = por %p108, %p109
      %s112 = sadd.s32 %s111, 1
      %p115 = scmp.eq.s32.totalorder %s23, 1
      %p116 = scmp.ne.s32.totalorder %s111, %s113
      %p117 = scmp.eq.s32.totalorder %s23, 0
      %p118 = por %p116, %p117
      %p119 = scmp.ne.s32.totalorder %s111, %s113
      %p120 = scmp.eq.s32.totalorder %s28, 1
      %p121 = por %p119, %p120
      %p122 = scmp.ne.s32.totalorder %s113, %s114
      %p123 = scmp.eq.s32.totalorder %s28, 0
      %p124 = por %p122, %p123
      %p125 = scmp.ne.s32.totalorder %s113, %s114
      %p126 = scmp.eq.s32.totalorder %s29, 1
      %p127 = por %p125, %p126
      %p129 = scmp.ne.s32.totalorder %s114, %s128
      %p130 = scmp.eq.s32.totalorder %s29, 0
      %p131 = por %p129, %p130
      %s133 = sadd.s32 %s132, 1
      %p136 = scmp.eq.s32.totalorder %s23, 1
      %p137 = scmp.ne.s32.totalorder %s132, %s134
      %p138 = scmp.eq.s32.totalorder %s23, 0
      %p139 = por %p137, %p138
      %p140 = scmp.ne.s32.totalorder %s132, %s134
      %p141 = scmp.eq.s32.totalorder %s28, 1
      %p142 = por %p140, %p141
      %p143 = scmp.ne.s32.totalorder %s134, %s135
      %p144 = scmp.eq.s32.totalorder %s28, 0
      %p145 = por %p143, %p144
      %p146 = scmp.ne.s32.totalorder %s134, %s135
      %p147 = scmp.eq.s32.totalorder %s29, 1
      %p148 = por %p146, %p147
      %p150 = scmp.ne.s32.totalorder %s135, %s149
      %p151 = scmp.eq.s32.totalorder %s29, 0
      %p152 = por %p150, %p151
      %s154 = sadd.s32 %s153, 1
      %p157 = scmp.eq.s32.totalorder %s23, 1
      %p158 = scmp.ne.s32.totalorder %s153, %s155
      %p159 = scmp.eq.s32.totalorder %s23, 0
      %p160 = por %p158, %p159
      %p161 = scmp.ne.s32.totalorder %s153, %s155
      %p162 = scmp.eq.s32.totalorder %s28, 1
      %p163 = por %p161, %p162
      %p164 = scmp.ne.s32.totalorder %s155, %s156
      %p165 = scmp.eq.s32.totalorder %s28, 0
      %p166 = por %p164, %p165
      %p167 = scmp.ne.s32.totalorder %s155, %s156
      %p168 = scmp.eq.s32.totalorder %s29, 1
      %p169 = por %p167, %p168
      %p171 = scmp.ne.s32.totalorder %s156, %s170
      %p172 = scmp.eq.s32.totalorder %s29, 0
      %p173 = por %p171, %p172
      %s175 = sadd.s32 %s174, 1
      %p178 = scmp.eq.s32.totalorder %s23, 1
      %p179 = scmp.ne.s32.totalorder %s174, %s176
      %p180 = scmp.eq.s32.totalorder %s23, 0
      %p181 = por %p179, %p180
      %p182 = scmp.ne.s32.totalorder %s174, %s176
      %p183 = scmp.eq.s32.totalorder %s28, 1
      %p184 = por %p182, %p183
      %p185 = scmp.ne.s32.totalorder %s176, %s177
      %p186 = scmp.eq.s32.totalorder %s28, 0
      %p187 = por %p185, %p186
      %p188 = scmp.ne.s32.totalorder %s176, %s177
      %p189 = scmp.eq.s32.totalorder %s29, 1
      %p190 = por %p188, %p189
      %p192 = scmp.ne.s32.totalorder %s177, %s191
      %p193 = scmp.eq.s32.totalorder %s29, 0
      %p194 = por %p192, %p193
      %s196 = sadd.s32 %s195, 1
      %p199 = scmp.eq.s32.totalorder %s23, 1
      %p200 = scmp.ne.s32.totalorder %s195, %s197
      %p201 = scmp.eq.s32.totalorder %s23, 0
      %p202 = por %p200, %p201
      %p203 = scmp.ne.s32.totalorder %s195, %s197
      %p204 = scmp.eq.s32.totalorder %s28, 1
      %p205 = por %p203, %p204
      %p206 = scmp.ne.s32.totalorder %s197, %s198
      %p207 = scmp.eq.s32.totalorder %s28, 0
      %p208 = por %p206, %p207
      %p209 = scmp.ne.s32.totalorder %s197, %s198
      %p210 = scmp.eq.s32.totalorder %s29, 1
      %p211 = por %p209, %p210
      %p213 = scmp.ne.s32.totalorder %s198, %s212
      %p214 = scmp.eq.s32.totalorder %s29, 0
      %p215 = por %p213, %p214
      %s217 = sadd.s32 %s216, 1
      %p220 = scmp.eq.s32.totalorder %s23, 1
      %p221 = scmp.ne.s32.totalorder %s216, %s218
      %p222 = scmp.eq.s32.totalorder %s23, 0
      %p223 = por %p221, %p222
      %p224 = scmp.ne.s32.totalorder %s216, %s218
      %p225 = scmp.eq.s32.totalorder %s28, 1
      %p226 = por %p224, %p225
      %p227 = scmp.ne.s32.totalorder %s218, %s219
      %p228 = scmp.eq.s32.totalorder %s28, 0
      %p229 = por %p227, %p228
      %p230 = scmp.ne.s32.totalorder %s218, %s219
      %p231 = scmp.eq.s32.totalorder %s29, 1
      %p232 = por %p230, %p231
      %p234 = scmp.ne.s32.totalorder %s219, %s233
      %p235 = scmp.eq.s32.totalorder %s29, 0
      %p236 = por %p234, %p235
      %s237 = ssub.s32 %s30, %s42
      %s238 = ssub.s32 %s31, %s38
      %s239 = sor.u32 %s237, %s238
      %p240 = scmp.eq.s32.totalorder %s239, 0
      %s242 = sadd.s32 %s241, 1
      %s243 = scalar_select %p240, %s241, %s242
      %p246 = pneg %p240
      %p247 = scmp.eq.s32.totalorder %s23, 1
      %p248 = por %p246, %p247
      %p249 = scmp.ne.s32.totalorder %s241, %s244
      %p250 = scmp.eq.s32.totalorder %s23, 0
      %p251 = por %p249, %p250
      %p252 = scmp.ne.s32.totalorder %s241, %s244
      %p253 = scmp.eq.s32.totalorder %s28, 1
      %p254 = por %p252, %p253
      %p255 = scmp.ne.s32.totalorder %s244, %s245
      %p256 = scmp.eq.s32.totalorder %s28, 0
      %p257 = por %p255, %p256
      %p258 = scmp.ne.s32.totalorder %s244, %s245
      %p259 = scmp.eq.s32.totalorder %s29, 1
      %p260 = por %p258, %p259
      %p262 = scmp.ne.s32.totalorder %s245, %s261
      %p263 = scmp.eq.s32.totalorder %s29, 0
      %p264 = por %p262, %p263
      %p265 = scmp.le.s32.totalorder 1, %s23
      %p266 = scmp.lt.s32.totalorder %s23, 3
      %p267 = pnand %p265, %p266
      %p268 = pneg %p267
      // Predicated region
      $region9: #{tpu_custom_call.1} parent=5 // pred_check
        _
      $region10: #{tpu_custom_call.1} parent=5 // pred_check_branch
        %270 = sbr.rel (%p267) target = $region12
      $region11: #{tpu_custom_call.1} parent=5 // pred_region
        %s271 = ssub.s32 %s23, 1
        // Predicated region
        $region13: #{tpu_custom_call.1} parent=11 // pred_check
          %p272 = pneg %p82
        $region14: #{tpu_custom_call.1} parent=11 // pred_check_branch
          %274 = sbr.rel (%p272) target = $region16
        $region15: #{tpu_custom_call.1} parent=11 // pred_region
          %276 = vsyncadd [#allocation7], 0
          %s277 = sshll.u32 %s1, 4
          %s278 = int_to_ptr.hbm [resolvable:$true] %s277
          %s279 = sshll.u32 [#allocation6], 4
          %s280 = int_to_ptr.vmem [resolvable:$true] %s279
          %285 = dma.hbm_to_vmem [thread:$0]  %s278, 256, %s280, [#allocation7], 64, 64, 4
        $region16: #{tpu_custom_call.1} parent=11 // pred_fallthru
          _
        // Predicated region
        $region17: #{tpu_custom_call.1} parent=11 // pred_check
          %p286 = pneg %p103
        $region18: #{tpu_custom_call.1} parent=11 // pred_check_branch
          %288 = sbr.rel (%p286) target = $region20
        $region19: #{tpu_custom_call.1} parent=11 // pred_region
          _
        $region20: #{tpu_custom_call.1} parent=11 // pred_fallthru
          _
        // Predicated region
        $region21: #{tpu_custom_call.1} parent=11 // pred_check
          %p289 = pneg %p124
        $region22: #{tpu_custom_call.1} parent=11 // pred_check_branch
          %291 = sbr.rel (%p289) target = $region24
        $region23: #{tpu_custom_call.1} parent=11 // pred_region
          %293 = vsyncadd [#allocation7], 0
          %s294 = sshll.u32 %s3, 4
          %s295 = int_to_ptr.hbm [resolvable:$true] %s294
          %s296 = sshll.u32 [#allocation8], 4
          %s297 = int_to_ptr.vmem [resolvable:$true] %s296
          %302 = dma.hbm_to_vmem [thread:$0]  %s295, 256, %s297, [#allocation7], 64, 64, 4
        $region24: #{tpu_custom_call.1} parent=11 // pred_fallthru
          _
        // Predicated region
        $region25: #{tpu_custom_call.1} parent=11 // pred_check
          %p303 = pneg %p145
        $region26: #{tpu_custom_call.1} parent=11 // pred_check_branch
          %305 = sbr.rel (%p303) target = $region28
        $region27: #{tpu_custom_call.1} parent=11 // pred_region
          _
        $region28: #{tpu_custom_call.1} parent=11 // pred_fallthru
          _
        // Predicated region
        $region29: #{tpu_custom_call.1} parent=11 // pred_check
          %p306 = pneg %p166
        $region30: #{tpu_custom_call.1} parent=11 // pred_check_branch
          %308 = sbr.rel (%p306) target = $region32
        $region31: #{tpu_custom_call.1} parent=11 // pred_region
          %310 = vsyncadd [#allocation10], 0
          %s311 = sshll.u32 %s5, 4
          %s312 = int_to_ptr.hbm [resolvable:$true] %s311
          %s313 = sshll.u32 [#allocation9], 4
          %s314 = int_to_ptr.vmem [resolvable:$true] %s313
          %319 = dma.hbm_to_vmem [thread:$0]  %s312, 256, %s314, [#allocation10], 64, 64, 4
        $region32: #{tpu_custom_call.1} parent=11 // pred_fallthru
          _
        // Predicated region
        $region33: #{tpu_custom_call.1} parent=11 // pred_check
          %p320 = pneg %p187
        $region34: #{tpu_custom_call.1} parent=11 // pred_check_branch
          %322 = sbr.rel (%p320) target = $region36
        $region35: #{tpu_custom_call.1} parent=11 // pred_region
          _
        $region36: #{tpu_custom_call.1} parent=11 // pred_fallthru
          _
        // Predicated region
        $region37: #{tpu_custom_call.1} parent=11 // pred_check
          %p323 = pneg %p208
        $region38: #{tpu_custom_call.1} parent=11 // pred_check_branch
          %325 = sbr.rel (%p323) target = $region40
        $region39: #{tpu_custom_call.1} parent=11 // pred_region
          _
        $region40: #{tpu_custom_call.1} parent=11 // pred_fallthru
          _
        // Predicated region
        $region41: #{tpu_custom_call.1} parent=11 // pred_check
          %p326 = pneg %p229
        $region42: #{tpu_custom_call.1} parent=11 // pred_check_branch
          %328 = sbr.rel (%p326) target = $region44
        $region43: #{tpu_custom_call.1} parent=11 // pred_region
          _
        $region44: #{tpu_custom_call.1} parent=11 // pred_fallthru
          _
      $region12: #{tpu_custom_call.1} parent=5 // pred_fallthru
        _
      %p329 = scmp.lt.s32.totalorder %s23, 2
      // Predicated region
      $region45: #{tpu_custom_call.1} parent=5 // pred_check
        %p330 = pneg %p329
      $region46: #{tpu_custom_call.1} parent=5 // pred_check_branch
        %332 = sbr.rel (%p330) target = $region48
      $region47: #{tpu_custom_call.1} parent=5 // pred_region
        // Predicated region
        $region49: #{tpu_custom_call.1} parent=47 // pred_check
          %p333 = pneg %p55
        $region50: #{tpu_custom_call.1} parent=47 // pred_check_branch
          %335 = sbr.rel (%p333) target = $region52
        $region51: #{tpu_custom_call.1} parent=47 // pred_region
          %s336 = sand.u32 %s45, 1
          %s337 = scalar_lea.sflag [#allocation4], %s336
          %s338 = sand.u32 %s45, 1
          %s339 = smul.addr %s338, 8
          %s340 = scalar_lea.vmem [#allocation3], %s339
          %342 = vsyncadd %s337, 0
          %s343 = smul.addr %s30, 8
          %s344 = scalar_lea.hbm %s0, %s343
          %s346 = sshll.u32 %s344, 4
          %s347 = int_to_ptr.hbm [resolvable:$true] %s346
          %s348 = sshll.u32 %s340, 4
          %s349 = int_to_ptr.vmem [resolvable:$true] %s348
          %351 = dma.hbm_to_vmem [thread:$0]  %s347, 128, %s349, %s337
        $region52: #{tpu_custom_call.1} parent=47 // pred_fallthru
          _
      $region48: #{tpu_custom_call.1} parent=5 // pred_fallthru
        _
      %p352 = scmp.le.s32.totalorder 1, %s23
      %p353 = scmp.lt.s32.totalorder %s23, 3
      %p354 = pnand %p352, %p353
      %p355 = pneg %p354
      // Predicated region
      $region53: #{tpu_custom_call.1} parent=5 // pred_check
        _
      $region54: #{tpu_custom_call.1} parent=5 // pred_check_branch
        %357 = sbr.rel (%p354) target = $region56
      $region55: #{tpu_custom_call.1} parent=5 // pred_region
        %s358 = ssub.s32 %s23, 1
        %s359 = sand.u32 %s48, 1
        %s360 = scalar_lea.sflag [#allocation4], %s359
        %s361 = sand.u32 %s48, 1
        %s362 = smul.addr %s361, 8
        %s363 = scalar_lea.vmem [#allocation3], %s362
        // Predicated region
        $region57: #{tpu_custom_call.1} parent=55 // pred_check
          %p364 = pneg %p61
        $region58: #{tpu_custom_call.1} parent=55 // pred_check_branch
          %366 = sbr.rel (%p364) target = $region60
        $region59: #{tpu_custom_call.1} parent=55 // pred_region
          %368 = dma.done %s360, 128
        $region60: #{tpu_custom_call.1} parent=55 // pred_fallthru
          _
        // Predicated region
        $region61: #{tpu_custom_call.1} parent=55 // pred_check
          %p369 = pneg %p82
        $region62: #{tpu_custom_call.1} parent=55 // pred_check_branch
          %371 = sbr.rel (%p369) target = $region64
        $region63: #{tpu_custom_call.1} parent=55 // pred_region
          %373 = dma.done [#allocation7], 256
        $region64: #{tpu_custom_call.1} parent=55 // pred_fallthru
          _
        // Predicated region
        $region65: #{tpu_custom_call.1} parent=55 // pred_check
          %p374 = pneg %p124
        $region66: #{tpu_custom_call.1} parent=55 // pred_check_branch
          %376 = sbr.rel (%p374) target = $region68
        $region67: #{tpu_custom_call.1} parent=55 // pred_region
          %378 = dma.done [#allocation7], 256
        $region68: #{tpu_custom_call.1} parent=55 // pred_fallthru
          _
        // Predicated region
        $region69: #{tpu_custom_call.1} parent=55 // pred_check
          %p379 = pneg %p166
        $region70: #{tpu_custom_call.1} parent=55 // pred_check_branch
          %381 = sbr.rel (%p379) target = $region72
        $region71: #{tpu_custom_call.1} parent=55 // pred_region
          %383 = dma.done [#allocation10], 256
        $region72: #{tpu_custom_call.1} parent=55 // pred_fallthru
          _
        %s384 = sand.u32 %s48, 1
        %s385 = scalar_lea.sflag [#allocation4], %s384
        %s386 = sand.u32 %s48, 1
        %s387 = smul.addr %s386, 8
        %s388 = scalar_lea.vmem [#allocation3], %s387
        %p389 = pneg %p61
        %p390 = pneg %p58
        %p391 = pneg %p82
        %p392 = pneg %p79
        %p393 = pneg %p103
        %p394 = pneg %p100
        %p395 = pneg %p124
        %p396 = pneg %p121
        %p397 = pneg %p145
        %p398 = pneg %p142
        %p399 = pneg %p166
        %p400 = pneg %p163
        %p401 = pneg %p187
        %p402 = pneg %p184
        %p403 = pneg %p208
        %p404 = pneg %p205
        %p405 = pneg %p229
        %p406 = pneg %p226
        %p407 = pneg %p257
        %p408 = pneg %p254
        %s409 = sand.u32 %s244, 1
        %s410 = scalar_lea.sflag [#allocation5], %s409
        %s411 = sand.u32 %s244, 1
        %s412 = smul.addr %s411, 8
        %s413 = scalar_lea.vmem [#allocation11], %s412
        %v415 = vld [vmem:[%s363] sm:$0xff]
        %v416 = vpack.c.bf16 %v415, %v415
        %v417 = vld [vmem:[#allocation6] sm:$0xf]
        %v418 = vld [vmem:[#allocation6 + $0x4] sm:$0xf]
        %v419 = vld [vmem:[#allocation6 + $0x8] sm:$0xf]
        %v420 = vld [vmem:[#allocation6 + $0xc] sm:$0xf]
        %v421 = vld [vmem:[%s2] sm:$0x1]
        %v423 = vperm.slane %v421, 0
        %v429 = vunpack.c.l.b16 %v417
        %v430 = vunpack.c.l.b16 %v418
        %v431 = vunpack.c.l.b16 %v419
        %v432 = vunpack.c.l.b16 %v420
        %v433 = vpack.c.b16 %v430, %v429
        %v434 = vpack.c.b16 %v432, %v431
        %vm437 = vcmask 261120
        %v439 = vsel %vm437, %v416, 0
        %441 = vmatpush.bf16.msra.mxu0 0
        %442 = vmatpush.bf16.msra.mxu0 0
        %443 = vmatpush.bf16.msra.mxu0 0
        %444 = vmatpush.bf16.msra.mxu0 0
        %445 = vmatpush.bf16.msra.mxu0 0
        %446 = vmatpush.bf16.msra.mxu0 0
        %447 = vmatpush.bf16.msra.mxu0 %v434
        %448 = vmatpush.bf16.msra.mxu0 %v433
        %449 = vmatmul.bf16.gmra.mxu0 %v439
        %v450 = vpop.f32.mrf.mxu0
        %v451 = vadd.f32 %v423, %v450
        %v452 = vpop.f32.mrf.mxu0
        %453 = vdwg.mxu0
        %v454 = vld [vmem:[#allocation8] sm:$0xf]
        %v455 = vld [vmem:[#allocation8 + $0x4] sm:$0xf]
        %v456 = vld [vmem:[#allocation8 + $0x8] sm:$0xf]
        %v457 = vld [vmem:[#allocation8 + $0xc] sm:$0xf]
        %v458 = vld [vmem:[%s4] sm:$0x1]
        %v460 = vperm.slane %v458, 0
        %v466 = vunpack.c.l.b16 %v454
        %v467 = vunpack.c.l.b16 %v455
        %v468 = vunpack.c.l.b16 %v456
        %v469 = vunpack.c.l.b16 %v457
        %v470 = vpack.c.b16 %v467, %v466
        %v471 = vpack.c.b16 %v469, %v468
        %474 = vmatpush.bf16.msra.mxu0 0
        %475 = vmatpush.bf16.msra.mxu0 0
        %476 = vmatpush.bf16.msra.mxu0 0
        %477 = vmatpush.bf16.msra.mxu0 0
        %478 = vmatpush.bf16.msra.mxu0 0
        %479 = vmatpush.bf16.msra.mxu0 0
        %480 = vmatpush.bf16.msra.mxu0 %v471
        %481 = vmatpush.bf16.msra.mxu0 %v470
        %482 = vmatmul.bf16.gmra.mxu0 %v439
        %v483 = vpop.f32.mrf.mxu0
        %v484 = vadd.f32 %v460, %v483
        %v485 = vpop.f32.mrf.mxu0
        %486 = vdwg.mxu0
        %v487 = vpack.c.bf16 %v451, %v451
        %v488 = vpack.c.bf16 %v484, %v484
        %vm489 = vcmask 64512
        %v491 = vsel %vm489, %v487, 0
        %v494 = vsel %vm489, %v488, 0
        %496 = vmatpush.bf16.xpose.msra.mxu0 0
        %497 = vmatpush.bf16.xpose.msra.mxu0 0
        %498 = vmatpush.bf16.xpose.msra.mxu0 0
        %499 = vmatpush.bf16.xpose.msra.mxu0 0
        %500 = vmatpush.bf16.xpose.msra.mxu0 0
        %501 = vmatpush.bf16.xpose.msra.mxu0 0
        %502 = vmatpush.bf16.xpose.msra.mxu0 0
        %503 = vmatpush.bf16.xpose.msra.mxu0 %v494
        %504 = vmatmul.bf16.gmra.mxu0 %v491
        %v505 = vpop.f32.mrf.mxu0
        %v506 = vadd.f32 0.0, %v505
        %v507 = vpop.f32.mrf.mxu0
        %508 = vdwg.mxu0
        %v509 = vsel %vm489, %v506, -inf
        %510 = vmax.xlane.f32.xlu0 %v509
        %v511 = vpop.xlane.xlu0 %510
        %v512 = vsub.f32 %v506, %v511
        %v513 = vmul.f32 %v512, 1.442695
        %v514 = vpow.pop %v513
        %v515 = vsel %vm489, %v514, 0.0
        %516 = vadd.xlane.f32.xlu0 %v515
        %v517 = vpop.xlane.xlu0 %516
        %v518 = vrcp.pop %v517
        %v519 = vmul.f32 %v514, %v518
        %v520 = vpack.c.bf16 %v519, %v519
        %522 = vrot.lane.b32.xlu0 %v488, 96
        %v523 = vpop.permute.xlu0 %522
        %v525 = vsel %vm489, %v520, 0
        %vm527 = vcmask 1043456
        %v529 = vsel %vm527, %v523, 0
        %531 = vmatpush.bf16.msra.mxu0 0
        %532 = vmatpush.bf16.msra.mxu0 0
        %533 = vmatpush.bf16.msra.mxu0 0
        %534 = vmatpush.bf16.msra.mxu0 0
        %535 = vmatpush.bf16.msra.mxu0 0
        %536 = vmatpush.bf16.msra.mxu0 0
        %537 = vmatpush.bf16.msra.mxu0 0
        %538 = vmatpush.bf16.msra.mxu0 %v529
        %539 = vmatmul.bf16.gmra.mxu0 %v525
        %v540 = vpop.f32.mrf.mxu0
        %v541 = vadd.f32 0.0, %v540
        %v542 = vpop.f32.mrf.mxu0
        %543 = vdwg.mxu0
        %v544 = vpack.c.bf16 %v541, %v541
        %vm545 = vcmask 60416
        %546 = vst.msk [vmem:[#allocation2] sm:$0xf] %vm545, %v544
        %548 = vrot.lane.b32.xlu0 %v487, 120
        %v549 = vpop.permute.xlu0 %548
        %550 = vrot.lane.b32.xlu0 %v488, 120
        %v551 = vpop.permute.xlu0 %550
        %v553 = vsel %vm489, %v549, 0
        %v556 = vsel %vm489, %v551, 0
        %558 = vmatpush.bf16.xpose.msra.mxu0 0
        %559 = vmatpush.bf16.xpose.msra.mxu0 0
        %560 = vmatpush.bf16.xpose.msra.mxu0 0
        %561 = vmatpush.bf16.xpose.msra.mxu0 0
        %562 = vmatpush.bf16.xpose.msra.mxu0 0
        %563 = vmatpush.bf16.xpose.msra.mxu0 0
        %564 = vmatpush.bf16.xpose.msra.mxu0 0
        %565 = vmatpush.bf16.xpose.msra.mxu0 %v556
        %566 = vmatmul.bf16.gmra.mxu0 %v553
        %v567 = vpop.f32.mrf.mxu0
        %v568 = vadd.f32 0.0, %v567
        %v569 = vpop.f32.mrf.mxu0
        %570 = vdwg.mxu0
        %v571 = vsel %vm489, %v568, -inf
        %572 = vmax.xlane.f32.xlu0 %v571
        %v573 = vpop.xlane.xlu0 %572
        %v574 = vsub.f32 %v568, %v573
        %v575 = vmul.f32 %v574, 1.442695
        %v576 = vpow.pop %v575
        %v577 = vsel %vm489, %v576, 0.0
        %578 = vadd.xlane.f32.xlu0 %v577
        %v579 = vpop.xlane.xlu0 %578
        %v580 = vrcp.pop %v579
        %v581 = vmul.f32 %v576, %v580
        %v582 = vpack.c.bf16 %v581, %v581
        %583 = vrot.lane.b32.xlu0 %v488, 88
        %v584 = vpop.permute.xlu0 %583
        %v586 = vsel %vm489, %v582, 0
        %v589 = vsel %vm527, %v584, 0
        %591 = vmatpush.bf16.msra.mxu0 0
        %592 = vmatpush.bf16.msra.mxu0 0
        %593 = vmatpush.bf16.msra.mxu0 0
        %594 = vmatpush.bf16.msra.mxu0 0
        %595 = vmatpush.bf16.msra.mxu0 0
        %596 = vmatpush.bf16.msra.mxu0 0
        %597 = vmatpush.bf16.msra.mxu0 0
        %598 = vmatpush.bf16.msra.mxu0 %v589
        %599 = vmatmul.bf16.gmra.mxu0 %v586
        %v600 = vpop.f32.mrf.mxu0
        %v601 = vadd.f32 0.0, %v600
        %v602 = vpop.f32.mrf.mxu0
        %603 = vdwg.mxu0
        %v604 = vpack.c.bf16 %v601, %v601
        %606 = vrot.lane.b32.xlu0 %v604, 8
        %v607 = vpop.permute.xlu0 %606
        %vm609 = vcmask 126016
        %610 = vst.msk [vmem:[#allocation2] sm:$0xf] %vm609, %v607
        %611 = vrot.lane.b32.xlu0 %v487, 112
        %v612 = vpop.permute.xlu0 %611
        %613 = vrot.lane.b32.xlu0 %v488, 112
        %v614 = vpop.permute.xlu0 %613
        %v616 = vsel %vm489, %v612, 0
        %v619 = vsel %vm489, %v614, 0
        %621 = vmatpush.bf16.xpose.msra.mxu0 0
        %622 = vmatpush.bf16.xpose.msra.mxu0 0
        %623 = vmatpush.bf16.xpose.msra.mxu0 0
        %624 = vmatpush.bf16.xpose.msra.mxu0 0
        %625 = vmatpush.bf16.xpose.msra.mxu0 0
        %626 = vmatpush.bf16.xpose.msra.mxu0 0
        %627 = vmatpush.bf16.xpose.msra.mxu0 0
        %628 = vmatpush.bf16.xpose.msra.mxu0 %v619
        %629 = vmatmul.bf16.gmra.mxu0 %v616
        %v630 = vpop.f32.mrf.mxu0
        %v631 = vadd.f32 0.0, %v630
        %v632 = vpop.f32.mrf.mxu0
        %633 = vdwg.mxu0
        %v634 = vsel %vm489, %v631, -inf
        %635 = vmax.xlane.f32.xlu0 %v634
        %v636 = vpop.xlane.xlu0 %635
        %v637 = vsub.f32 %v631, %v636
        %v638 = vmul.f32 %v637, 1.442695
        %v639 = vpow.pop %v638
        %v640 = vsel %vm489, %v639, 0.0
        %641 = vadd.xlane.f32.xlu0 %v640
        %v642 = vpop.xlane.xlu0 %641
        %v643 = vrcp.pop %v642
        %v644 = vmul.f32 %v639, %v643
        %v645 = vpack.c.bf16 %v644, %v644
        %646 = vrot.lane.b32.xlu0 %v488, 80
        %v647 = vpop.permute.xlu0 %646
        %v649 = vsel %vm489, %v645, 0
        %v652 = vsel %vm527, %v647, 0
        %654 = vmatpush.bf16.msra.mxu0 0
        %655 = vmatpush.bf16.msra.mxu0 0
        %656 = vmatpush.bf16.msra.mxu0 0
        %657 = vmatpush.bf16.msra.mxu0 0
        %658 = vmatpush.bf16.msra.mxu0 0
        %659 = vmatpush.bf16.msra.mxu0 0
        %660 = vmatpush.bf16.msra.mxu0 0
        %661 = vmatpush.bf16.msra.mxu0 %v652
        %662 = vmatmul.bf16.gmra.mxu0 %v649
        %v663 = vpop.f32.mrf.mxu0
        %v664 = vadd.f32 0.0, %v663
        %v665 = vpop.f32.mrf.mxu0
        %666 = vdwg.mxu0
        %v667 = vpack.c.bf16 %v664, %v664
        %669 = vrot.lane.b32.xlu0 %v667, 16
        %v670 = vpop.permute.xlu0 %669
        %vm672 = vcmask 191616
        %673 = vst.msk [vmem:[#allocation2] sm:$0xf] %vm672, %v670
        %674 = vrot.lane.b32.xlu0 %v487, 104
        %v675 = vpop.permute.xlu0 %674
        %676 = vrot.lane.b32.xlu0 %v488, 104
        %v677 = vpop.permute.xlu0 %676
        %v679 = vsel %vm489, %v675, 0
        %v682 = vsel %vm489, %v677, 0
        %684 = vmatpush.bf16.xpose.msra.mxu0 0
        %685 = vmatpush.bf16.xpose.msra.mxu0 0
        %686 = vmatpush.bf16.xpose.msra.mxu0 0
        %687 = vmatpush.bf16.xpose.msra.mxu0 0
        %688 = vmatpush.bf16.xpose.msra.mxu0 0
        %689 = vmatpush.bf16.xpose.msra.mxu0 0
        %690 = vmatpush.bf16.xpose.msra.mxu0 0
        %691 = vmatpush.bf16.xpose.msra.mxu0 %v682
        %692 = vmatmul.bf16.gmra.mxu0 %v679
        %v693 = vpop.f32.mrf.mxu0
        %v694 = vadd.f32 0.0, %v693
        %v695 = vpop.f32.mrf.mxu0
        %696 = vdwg.mxu0
        %v697 = vsel %vm489, %v694, -inf
        %698 = vmax.xlane.f32.xlu0 %v697
        %v699 = vpop.xlane.xlu0 %698
        %v700 = vsub.f32 %v694, %v699
        %v701 = vmul.f32 %v700, 1.442695
        %v702 = vpow.pop %v701
        %v703 = vsel %vm489, %v702, 0.0
        %704 = vadd.xlane.f32.xlu0 %v703
        %v705 = vpop.xlane.xlu0 %704
        %v706 = vrcp.pop %v705
        %v707 = vmul.f32 %v702, %v706
        %v708 = vpack.c.bf16 %v707, %v707
        %709 = vrot.lane.b32.xlu0 %v488, 72
        %v710 = vpop.permute.xlu0 %709
        %v712 = vsel %vm489, %v708, 0
        %v715 = vsel %vm527, %v710, 0
        %717 = vmatpush.bf16.msra.mxu0 0
        %718 = vmatpush.bf16.msra.mxu0 0
        %719 = vmatpush.bf16.msra.mxu0 0
        %720 = vmatpush.bf16.msra.mxu0 0
        %721 = vmatpush.bf16.msra.mxu0 0
        %722 = vmatpush.bf16.msra.mxu0 0
        %723 = vmatpush.bf16.msra.mxu0 0
        %724 = vmatpush.bf16.msra.mxu0 %v715
        %725 = vmatmul.bf16.gmra.mxu0 %v712
        %v726 = vpop.f32.mrf.mxu0
        %v727 = vadd.f32 0.0, %v726
        %v728 = vpop.f32.mrf.mxu0
        %729 = vdwg.mxu0
        %v730 = vpack.c.bf16 %v727, %v727
        %732 = vrot.lane.b32.xlu0 %v730, 24
        %v733 = vpop.permute.xlu0 %732
        %vm735 = vcmask 257216
        %736 = vst.msk [vmem:[#allocation2] sm:$0xf] %vm735, %v733
        %v737 = vld [vmem:[%s6] sm:$0x1]
        %v739 = vperm.slane %v737, 0
        %v741 = vadd.f32 %v415, %v739
        %v742 = vld [vmem:[#allocation2] sm:$0xf]
        %v743 = vld [vmem:[#allocation9] sm:$0xf]
        %v744 = vld [vmem:[#allocation9 + $0x4] sm:$0xf]
        %v745 = vld [vmem:[#allocation9 + $0x8] sm:$0xf]
        %v746 = vld [vmem:[#allocation9 + $0xc] sm:$0xf]
        %v751 = vunpack.c.l.b16 %v743
        %v752 = vunpack.c.l.b16 %v744
        %v753 = vunpack.c.l.b16 %v745
        %v754 = vunpack.c.l.b16 %v746
        %v755 = vpack.c.b16 %v752, %v751
        %v756 = vpack.c.b16 %v754, %v753
        %v760 = vsel %vm437, %v742, 0
        %762 = vmatpush.bf16.msra.mxu0 0
        %763 = vmatpush.bf16.msra.mxu0 0
        %764 = vmatpush.bf16.msra.mxu0 0
        %765 = vmatpush.bf16.msra.mxu0 0
        %766 = vmatpush.bf16.msra.mxu0 0
        %767 = vmatpush.bf16.msra.mxu0 0
        %768 = vmatpush.bf16.msra.mxu0 %v756
        %769 = vmatpush.bf16.msra.mxu0 %v755
        %770 = vmatmul.bf16.gmra.mxu0 %v760
        %v771 = vpop.f32.mrf.mxu0
        %v772 = vadd.f32 0.0, %v771
        %v773 = vpop.f32.mrf.mxu0
        %774 = vdwg.mxu0
        %v775 = vadd.f32 %v741, %v772
        %v776 = vsel %vm437, %v775, 0.0
        %777 = vadd.xlane.f32.xlu0 %v776
        %v778 = vpop.xlane.xlu0 %777
        %v779 = vrcp.pop 32.0
        %v780 = vmul.f32 32.0, %v779
        %v781 = vsub.f32 1.0, %v780
        %v782 = vmul.f32 %v779, %v781
        %v783 = vadd.f32 %v779, %v782
        %vm784 = vweird.f32 %v779
        %v785 = vsel %vm784, %v779, %v783
        %v786 = vmul.f32 %v778, %v785
        %v787 = vsub.f32 %v775, %v786
        %v788 = vmul.f32 %v787, %v787
        %v789 = vsel %vm437, %v788, 0.0
        %790 = vadd.xlane.f32.xlu0 %v789
        %v791 = vpop.xlane.xlu0 %790
        %v792 = vmul.f32 %v791, %v785
        %v793 = vadd.f32 %v792, 1e-05
        %v794 = vrsqrt.pop %v793
        %v795 = vmul.f32 %v794, %v793
        %v796 = vmul.f32 %v795, %v794
        %v797 = vmul.f32 0.5, %v796
        %v798 = vsub.f32 1.5, %v797
        %v799 = vmul.f32 %v794, %v798
        %vm800 = vweird.f32 %v793
        %vm801 = vweird.f32 %v794
        %vm802 = vmor %vm800, %vm801
        %v803 = vsel %vm802, %v794, %v799
        %v804 = vmul.f32 %v787, %v803
        %v805 = vld [vmem:[%s7] sm:$0x1]
        %v807 = vperm.slane %v805, 0
        %v809 = vmul.f32 %v804, %v807
        %v810 = vld [vmem:[%s8] sm:$0x1]
        %v812 = vperm.slane %v810, 0
        %v814 = vadd.f32 %v809, %v812
        %815 = vst.msk [vmem:[%s413] sm:$0xff] %vm437, %v814
        %s816 = sand.u32 %s244, 1
        %s817 = scalar_lea.sflag [#allocation5], %s816
        %s818 = sand.u32 %s244, 1
        %s819 = smul.addr %s818, 8
        %s820 = scalar_lea.vmem [#allocation11], %s819
        // Predicated region
        $region73: #{tpu_custom_call.1} parent=55 // pred_check
          %p821 = pneg %p254
        $region74: #{tpu_custom_call.1} parent=55 // pred_check_branch
          %823 = sbr.rel (%p821) target = $region76
        $region75: #{tpu_custom_call.1} parent=55 // pred_region
          %825 = vsyncadd %s817, 0
          %s826 = sadd.s32 %s33, %s32
          %s827 = smul.addr %s826, 8
          %s828 = scalar_lea.hbm %s9, %s827
          %s830 = sshll.u32 %s820, 4
          %s831 = int_to_ptr.vmem [resolvable:$true] %s830
          %s832 = sshll.u32 %s828, 4
          %s833 = int_to_ptr.hbm [resolvable:$true] %s832
          %835 = dma.vmem_to_hbm [thread:$0]  %s831, 128, %s833, %s817
        $region76: #{tpu_custom_call.1} parent=55 // pred_fallthru
          _
      $region56: #{tpu_custom_call.1} parent=5 // pred_fallthru
        _
      %p836 = scmp.le.s32.totalorder 2, %s23
      // Predicated region
      $region77: #{tpu_custom_call.1} parent=5 // pred_check
        %p837 = pneg %p836
      $region78: #{tpu_custom_call.1} parent=5 // pred_check_branch
        %839 = sbr.rel (%p837) target = $region80
      $region79: #{tpu_custom_call.1} parent=5 // pred_region
        %s840 = ssub.s32 %s23, 2
        // Predicated region
        $region81: #{tpu_custom_call.1} parent=79 // pred_check
          %p841 = pneg %p260
        $region82: #{tpu_custom_call.1} parent=79 // pred_check_branch
          %843 = sbr.rel (%p841) target = $region84
        $region83: #{tpu_custom_call.1} parent=79 // pred_region
          %s844 = sand.u32 %s245, 1
          %s845 = scalar_lea.sflag [#allocation5], %s844
          %s846 = sand.u32 %s245, 1
          %s847 = smul.addr %s846, 8
          %s848 = scalar_lea.vmem [#allocation11], %s847
          %850 = dma.done %s845, 128
        $region84: #{tpu_custom_call.1} parent=79 // pred_fallthru
          _
      $region80: #{tpu_custom_call.1} parent=5 // pred_fallthru
        _
    $region6: #{tpu_custom_call.1} parent=1 // loop_footer
      %s27 = sadd.s32 1, %s23
    $region7: #{tpu_custom_call.1} parent=1 // loop_footer_branch
      %22 = sbr.rel target = $region3
    $region8: #{tpu_custom_call.1} parent=1 // loop_exit
      _
    %851 = vsyncpa [#allocation4], 1
    %s852 = scalar_lea.sflag [#allocation4], 1
    %853 = vsyncpa %s852, 1
    %854 = vsyncpa [#allocation7], 1
    %855 = vsyncpa [#allocation10], 1
    %856 = vsyncpa [#allocation5], 1
    %s857 = scalar_lea.sflag [#allocation5], 1
    %858 = vsyncpa %s857, 1

</llo_original>
